<compile_context>
chip_gen: v6e
topology: v6e:2x2x1
jax: 0.10.0
libtpu: 0.0.40
codegen_flags: <defaults>
</compile_context>

<pallas_src>
import jax
import jax.numpy as jnp
from jax import lax
from jax.experimental import pallas as pl
from jax.experimental.pallas import tpu as pltpu


# ----------------------------------------------------------------------------
# Small helpers
# ----------------------------------------------------------------------------
def _vmem_limit_bytes():
    """Generation-aware VMEM cap (~60% of physical, capped at 100 MiB)."""
    try:
        cap = pltpu.get_tpu_info().vmem_capacity_bytes
    except Exception:
        cap = 128 * 1024 * 1024
    return int(min(0.6 * cap, 100 * 1024 * 1024))


def _largest_divisor(n, limit, align=1):
    """Largest d | n with d <= limit and d % align == 0; falls back to n."""
    best = None
    for d in range(1, min(n, limit) + 1):
        if n % d == 0 and d % align == 0:
            best = d
    return best if best is not None else n


def _head_time_tile(T, B, target_rows):
    if T * B <= target_rows:
        return T
    return _largest_divisor(T, max(1, target_rows // max(1, B)), align=8)


# ----------------------------------------------------------------------------
# Kernel A: hoisted input projection for both directions (bf16 MXU, f32 accum)
# ----------------------------------------------------------------------------
def input_projection_kernel(x_ref, wf_ref, wb_ref, bf_ref, bb_ref, gf_ref, gb_ref):
    # x: (tm, E) bf16 ; w*: (E, 4H) bf16 ; b*: (1, 4H) f32 ; g*: (tm, 4H) f32
    x = x_ref[...]
    gf_ref[...] = (jnp.dot(x, wf_ref[...], preferred_element_type=jnp.float32)
                   + bf_ref[...])
    gb_ref[...] = (jnp.dot(x, wb_ref[...], preferred_element_type=jnp.float32)
                   + bb_ref[...])


# ----------------------------------------------------------------------------
# Kernel B: fused bidirectional LSTM recurrence, streamed over time chunks
# ----------------------------------------------------------------------------
def bilstm_recurrence_kernel(gf_ref, gb_ref, whh_f_ref, whh_b_ref,
                             hf_out_ref, hb_out_ref,
                             hf_sc, cf_sc, hb_sc, cb_sc):
    # gf/gb : (tchunk, B, 4H) f32 pre-activations (fwd chunk i / bwd chunk n-1-i)
    # whh_* : (H, 4H) f32
    # h*_out: (tchunk, B, H) f32
    # *_sc  : (B, H) f32 running state, persists across grid steps
    tchunk = gf_ref.shape[0]
    H = whh_f_ref.shape[0]

    @pl.when(pl.program_id(0) == 0)
    def _init():
        hf_sc[...] = jnp.zeros_like(hf_sc)
        cf_sc[...] = jnp.zeros_like(cf_sc)
        hb_sc[...] = jnp.zeros_like(hb_sc)
        cb_sc[...] = jnp.zeros_like(cb_sc)

    def gate_math(pre, h, c, whh_ref):
        # whh is re-read from VMEM each step (cheap through the vld slots)
        # instead of being hoisted into values -> lower vreg pressure at big B*H.
        g = pre + jnp.dot(h, whh_ref[...], preferred_element_type=jnp.float32)
        i = jax.nn.sigmoid(g[:, 0:H])
        f = jax.nn.sigmoid(g[:, H:2 * H])
        gg = jnp.tanh(g[:, 2 * H:3 * H])
        o = jax.nn.sigmoid(g[:, 3 * H:4 * H])
        c_new = f * c + i * gg
        h_new = o * jnp.tanh(c_new)
        return h_new, c_new

    def body(s, carry):
        hf, cf, hb, cb = carry
        sb = tchunk - 1 - s                      # backward goes last -> first
        hf, cf = gate_math(gf_ref[s], hf, cf, whh_f_ref)
        hb, cb = gate_math(gb_ref[sb], hb, cb, whh_b_ref)
        hf_out_ref[s] = hf
        hb_out_ref[sb] = hb
        return (hf, cf, hb, cb)

    carry0 = (hf_sc[...], cf_sc[...], hb_sc[...], cb_sc[...])
    hf, cf, hb, cb = lax.fori_loop(0, tchunk, body, carry0, unroll=2)
    hf_sc[...] = hf
    cf_sc[...] = cf
    hb_sc[...] = hb
    cb_sc[...] = cb


# ----------------------------------------------------------------------------
# Kernel C: fused Linear(2H -> V) + Softmax head, batch-major writeback
# ----------------------------------------------------------------------------
def head_softmax_kernel(hf_ref, hb_ref, wf_ref, wb_ref, b_ref, out_ref):
    # hf/hb: (tt, B, H) f32 ; w*: (H, V) bf16 ; b: (1, V) f32 ; out: (B, tt, V) f32
    tt, B, H = hf_ref.shape
    V = out_ref.shape[-1]
    # Batch-major reorder on the small H-wide tile (much cheaper than
    # transposing the V-wide logits or the full output in HBM).
    hf = jnp.transpose(hf_ref[...], (1, 0, 2)).reshape(B * tt, H).astype(jnp.bfloat16)
    hb = jnp.transpose(hb_ref[...], (1, 0, 2)).reshape(B * tt, H).astype(jnp.bfloat16)
    logits = (jnp.dot(hf, wf_ref[...], preferred_element_type=jnp.float32)
              + jnp.dot(hb, wb_ref[...], preferred_element_type=jnp.float32)
              + b_ref[...])
    m = jnp.max(logits, axis=-1, keepdims=True)
    e = jnp.exp(logits - m)
    p = e / jnp.sum(e, axis=-1, keepdims=True)   # exact normalize: rows sum to 1
    out_ref[...] = p.reshape(B, tt, V)


# ----------------------------------------------------------------------------
# Wrapper
# ----------------------------------------------------------------------------
def bilstm_forward(tokens, params):
    """tokens: (B, T) int32 indices. Returns (B, T, num_words) softmax probs."""
    B, T = tokens.shape
    H = params["hidden_dim"]
    E = params["embed"].shape[1]
    V = params["b_head"].shape[-1]
    rows = T * B
    vmem_limit = _vmem_limit_bytes()

    # Embedding gather stays in plain JAX, laid out time-major flat (row = t*B+b).
    # TODO(synk): for huge vocabularies replace with a scalar-prefetch gather kernel.
    x_flat = params["embed"][tokens.T].reshape(rows, E).astype(jnp.bfloat16)

    wih_f = params["wih_f"].astype(jnp.bfloat16)          # (E, 4H)
    wih_b = params["wih_b"].astype(jnp.bfloat16)

    # --- Kernel A: row-tiled input projection (both directions). -------------
    tm = _largest_divisor(rows, 512, align=8)
    gates_f, gates_b = pl.pallas_call(
        input_projection_kernel,
        out_shape=(jax.ShapeDtypeStruct((rows, 4 * H), jnp.float32),
                   jax.ShapeDtypeStruct((rows, 4 * H), jnp.float32)),
        grid=(pl.cdiv(rows, tm),),
        in_specs=[pl.BlockSpec((tm, E), lambda i: (i, 0)),
                  pl.BlockSpec((E, 4 * H), lambda i: (0, 0)),
                  pl.BlockSpec((E, 4 * H), lambda i: (0, 0)),
                  pl.BlockSpec((1, 4 * H), lambda i: (0, 0)),
                  pl.BlockSpec((1, 4 * H), lambda i: (0, 0))],
        out_specs=(pl.BlockSpec((tm, 4 * H), lambda i: (i, 0)),
                   pl.BlockSpec((tm, 4 * H), lambda i: (i, 0))),
        compiler_params=pltpu.CompilerParams(
            dimension_semantics=("parallel",), vmem_limit_bytes=vmem_limit),
    )(x_flat, wih_f, wih_b, params["b_f"], params["b_b"])

    gates_f3 = gates_f.reshape(T, B, 4 * H)
    gates_b3 = gates_b.reshape(T, B, 4 * H)

    # --- Kernel B: serial recurrence, streamed over time chunks. -------------
    t_budget = max(1, (2 * 1024 * 1024) // max(1, B * 10 * H * 4))
    tchunk = _largest_divisor(T, max(1, min(T // 2 if T > 1 else 1, t_budget)))
    nchunks = T // tchunk

    h_f, h_b = pl.pallas_call(
        bilstm_recurrence_kernel,
        out_shape=(jax.ShapeDtypeStruct((T, B, H), jnp.float32),
                   jax.ShapeDtypeStruct((T, B, H), jnp.float32)),
        grid=(nchunks,),
        in_specs=[pl.BlockSpec((tchunk, B, 4 * H), lambda i: (i, 0, 0)),
                  pl.BlockSpec((tchunk, B, 4 * H), lambda i: (nchunks - 1 - i, 0, 0)),
                  pl.BlockSpec((H, 4 * H), lambda i: (0, 0)),
                  pl.BlockSpec((H, 4 * H), lambda i: (0, 0))],
        out_specs=(pl.BlockSpec((tchunk, B, H), lambda i: (i, 0, 0)),
                   pl.BlockSpec((tchunk, B, H), lambda i: (nchunks - 1 - i, 0, 0))),
        scratch_shapes=[pltpu.VMEM((B, H), jnp.float32) for _ in range(4)],
        compiler_params=pltpu.CompilerParams(
            dimension_semantics=("arbitrary",), vmem_limit_bytes=vmem_limit),
    )(gates_f3, gates_b3, params["whh_f"], params["whh_b"])

    # --- Kernel C: fused head, writes (B, T, V) directly. ---------------------
    w_head_f = params["w_head"][:H].astype(jnp.bfloat16)   # (H, V)
    w_head_b = params["w_head"][H:].astype(jnp.bfloat16)
    tt = _head_time_tile(T, B, target_rows=512)

    out = pl.pallas_call(
        head_softmax_kernel,
        out_shape=jax.ShapeDtypeStruct((B, T, V), jnp.float32),
        grid=(T // tt,),
        in_specs=[pl.BlockSpec((tt, B, H), lambda i: (i, 0, 0)),
                  pl.BlockSpec((tt, B, H), lambda i: (i, 0, 0)),
                  pl.BlockSpec((H, V), lambda i: (0, 0)),
                  pl.BlockSpec((H, V), lambda i: (0, 0)),
                  pl.BlockSpec((1, V), lambda i: (0, 0))],
        out_specs=pl.BlockSpec((B, tt, V), lambda i: (0, i, 0)),
        compiler_params=pltpu.CompilerParams(
            dimension_semantics=("parallel",), vmem_limit_bytes=vmem_limit),
    )(h_f, h_b, w_head_f, w_head_b, params["b_head"])
    return out


# ----------------------------------------------------------------------------
# Pure-JAX reference.  Matmul operands are rounded to bf16 (f32 accumulation)
# to mirror the kernels' MXU dtype path, so the comparison stays tight.
# ----------------------------------------------------------------------------
def bilstm_ref(tokens, params):
    def bf16(a):
        return a.astype(jnp.bfloat16).astype(jnp.float32)

    emb = params["embed"][tokens].astype(jnp.float32)       # (B, T, E)
    H = params["hidden_dim"]
    B, T, E = emb.shape
    hi = lax.Precision.HIGHEST

    def run_dir(x_tmajor, wih, whh, b):
        pre = jnp.einsum("tbe,ef->tbf", bf16(x_tmajor), bf16(wih), precision=hi) + b

        def step(carry, pre_t):
            h, c = carry
            g = pre_t + jnp.dot(h, whh, precision=hi)
            i = jax.nn.sigmoid(g[:, 0:H])
            f = jax.nn.sigmoid(g[:, H:2 * H])
            gg = jnp.tanh(g[:, 2 * H:3 * H])
            o = jax.nn.sigmoid(g[:, 3 * H:4 * H])
            c = f * c + i * gg
            h = o * jnp.tanh(c)
            return (h, c), h

        init = (jnp.zeros((B, H), jnp.float32), jnp.zeros((B, H), jnp.float32))
        _, hs = lax.scan(step, init, pre)
        return hs                                            # (T, B, H)

    x_t = jnp.transpose(emb, (1, 0, 2))
    hf = run_dir(x_t, params["wih_f"], params["whh_f"], params["b_f"])
    hb = run_dir(x_t[::-1], params["wih_b"], params["whh_b"], params["b_b"])[::-1]
    logits = (jnp.einsum("tbh,hv->tbv", bf16(hf), bf16(params["w_head"][:H]), precision=hi)
              + jnp.einsum("tbh,hv->tbv", bf16(hb), bf16(params["w_head"][H:]), precision=hi)
              + params["b_head"])
    probs = jax.nn.softmax(logits, axis=-1)                  # (T, B, V)
    return jnp.transpose(probs, (1, 0, 2))                   # (B, T, V)


# ----------------------------------------------------------------------------
# Deterministic parameter construction (shapes follow the nn.Module __init__)
# ----------------------------------------------------------------------------
def make_params(key, num_words, embed_dim, hidden_dim):
    H = hidden_dim
    ks = jax.random.split(key, 11)
    s = 0.1
    # nn.Embedding(num_words, embed_dim)
    embed = jax.random.normal(ks[0], (num_words, embed_dim), jnp.float32)

    # nn.LSTM(embed_dim, hidden_dim, bidirectional=True): per direction
    #   weight_ih (4H, E), weight_hh (4H, H), bias_ih (4H,), bias_hh (4H,)
    # stored pre-transposed; biases summed.  PyTorch gate order: i, f, g, o.
    def lstm_dir(k0, k1, k2, k3):
        wih = s * jax.random.normal(k0, (4 * H, embed_dim), jnp.float32)
        whh = s * jax.random.normal(k1, (4 * H, H), jnp.float32)
        bih = s * jax.random.normal(k2, (4 * H,), jnp.float32)
        bhh = s * jax.random.normal(k3, (4 * H,), jnp.float32)
        return wih.T, whh.T, (bih + bhh)[None, :]

    wih_f, whh_f, b_f = lstm_dir(ks[1], ks[2], ks[3], ks[4])
    wih_b, whh_b, b_b = lstm_dir(ks[5], ks[6], ks[7], ks[8])

    # nn.Linear(2H, num_words): weight (V, 2H), bias (V,)
    w_head_pt = s * jax.random.normal(ks[9], (num_words, 2 * H), jnp.float32)
    b_head = s * jax.random.normal(ks[10], (num_words,), jnp.float32)

    return {
        "embed": embed, "hidden_dim": H,
        "wih_f": wih_f, "whh_f": whh_f, "b_f": b_f,
        "wih_b": wih_b, "whh_b": whh_b, "b_b": b_b,
        "w_head": w_head_pt.T,            # (2H, V)
        "b_head": b_head[None, :],        # (1, V)
    }


if __name__ == "__main__":
    num_words, embed_dim, hidden_dim = 64, 32, 32
    B, T = 2, 8

    key = jax.random.PRNGKey(0)
    kp, kx = jax.random.split(key)
    params = make_params(kp, num_words, embed_dim, hidden_dim)
    tokens = jax.random.randint(kx, (B, T), 0, num_words, dtype=jnp.int32)

    out = jax.block_until_ready(bilstm_forward(tokens, params))
    assert out.shape == (B, T, num_words), out.shape

    # softmax rows sum to 1 (exact divide) and the output matches the reference
    ref = bilstm_ref(tokens, params)
    assert jnp.allclose(jnp.sum(out, axis=-1), 1.0, atol=1e-3)
    assert jnp.allclose(out, ref, atol=2e-3, rtol=2e-3), float(jnp.max(jnp.abs(out - ref)))

    print("KERNEL_OK")
</pallas_src>

<mosaic_0001>
module attributes {stable_mosaic.version = 11 : i64} {
  func.func @input_projection_kernel(%arg0: i32, %arg1: memref<16x32xbf16, #tpu.memory_space<vmem>>, %arg2: memref<32x128xbf16, #tpu.memory_space<vmem>>, %arg3: memref<32x128xbf16, #tpu.memory_space<vmem>>, %arg4: memref<1x128xf32, #tpu.memory_space<vmem>>, %arg5: memref<1x128xf32, #tpu.memory_space<vmem>>, %arg6: memref<16x128xf32, #tpu.memory_space<vmem>>, %arg7: memref<16x128xf32, #tpu.memory_space<vmem>>) attributes {dimension_semantics = [#tpu.dimension_semantics<parallel>], iteration_bounds = array<i64: 1>, scalar_prefetch = 0 : i64, scratch_operands = 0 : i64, tpu.core_type = #tpu.core_type<tc>, window_params = [{transform_indices = @transform_0, window_bounds = array<i64: 16, 32>}, {pipeline_mode = #tpu.pipeline_mode<synchronous>, transform_indices = @transform_1, window_bounds = array<i64: 32, 128>}, {pipeline_mode = #tpu.pipeline_mode<synchronous>, transform_indices = @transform_2, window_bounds = array<i64: 32, 128>}, {pipeline_mode = #tpu.pipeline_mode<synchronous>, transform_indices = @transform_3, window_bounds = array<i64: 1, 128>}, {pipeline_mode = #tpu.pipeline_mode<synchronous>, transform_indices = @transform_4, window_bounds = array<i64: 1, 128>}, {transform_indices = @transform_5, window_bounds = array<i64: 16, 128>}, {transform_indices = @transform_6, window_bounds = array<i64: 16, 128>}]} {
    %c0 = arith.constant 0 : index
    %c0_0 = arith.constant 0 : index
    %0 = vector.load %arg1[%c0, %c0_0] : memref<16x32xbf16, #tpu.memory_space<vmem>>, vector<16x32xbf16>
    %c0_1 = arith.constant 0 : index
    %c0_2 = arith.constant 0 : index
    %1 = vector.load %arg2[%c0_1, %c0_2] : memref<32x128xbf16, #tpu.memory_space<vmem>>, vector<32x128xbf16>
    %cst = arith.constant dense<0.000000e+00> : vector<16x128xf32>
    %2 = tpu.matmul %0, %1, %cst {dimension_numbers = #tpu.dot_dimension_numbers<[1], [0], [0], [1], [0, 0, 1, 1], [], []>} : vector<16x32xbf16>, vector<32x128xbf16>, vector<16x128xf32> -> vector<16x128xf32>
    %c0_3 = arith.constant 0 : index
    %c0_4 = arith.constant 0 : index
    %3 = vector.load %arg4[%c0_3, %c0_4] : memref<1x128xf32, #tpu.memory_space<vmem>>, vector<1x128xf32>
    %4 = vector.broadcast %3 : vector<1x128xf32> to vector<16x128xf32>
    %5 = arith.addf %2, %4 : vector<16x128xf32>
    %c0_5 = arith.constant 0 : index
    %c0_6 = arith.constant 0 : index
    %6 = vector.load %arg6[%c0_5, %c0_6] : memref<16x128xf32, #tpu.memory_space<vmem>>, vector<16x128xf32>
    tpu.vector_store %arg6[%c0_5, %c0_6], %5 {strides = array<i32>} : memref<16x128xf32, #tpu.memory_space<vmem>>, vector<16x128xf32>,
    %c0_7 = arith.constant 0 : index
    %c0_8 = arith.constant 0 : index
    %7 = vector.load %arg3[%c0_7, %c0_8] : memref<32x128xbf16, #tpu.memory_space<vmem>>, vector<32x128xbf16>
    %cst_9 = arith.constant dense<0.000000e+00> : vector<16x128xf32>
    %8 = tpu.matmul %0, %7, %cst_9 {dimension_numbers = #tpu.dot_dimension_numbers<[1], [0], [0], [1], [0, 0, 1, 1], [], []>} : vector<16x32xbf16>, vector<32x128xbf16>, vector<16x128xf32> -> vector<16x128xf32>
    %c0_10 = arith.constant 0 : index
    %c0_11 = arith.constant 0 : index
    %9 = vector.load %arg5[%c0_10, %c0_11] : memref<1x128xf32, #tpu.memory_space<vmem>>, vector<1x128xf32>
    %10 = vector.broadcast %9 : vector<1x128xf32> to vector<16x128xf32>
    %11 = arith.addf %8, %10 : vector<16x128xf32>
    %c0_12 = arith.constant 0 : index
    %c0_13 = arith.constant 0 : index
    %12 = vector.load %arg7[%c0_12, %c0_13] : memref<16x128xf32, #tpu.memory_space<vmem>>, vector<16x128xf32>
    tpu.vector_store %arg7[%c0_12, %c0_13], %11 {strides = array<i32>} : memref<16x128xf32, #tpu.memory_space<vmem>>, vector<16x128xf32>,
    return
  }
  func.func @transform_0(%arg0: i32) -> (i32, i32) {
    %c0_i32 = arith.constant 0 : i32
    %c0_i32_0 = arith.constant 0 : i32
    return %arg0, %c0_i32 : i32, i32
  }
  func.func @transform_1(%arg0: i32) -> (i32, i32) {
    %c0_i32 = arith.constant 0 : i32
    %c0_i32_0 = arith.constant 0 : i32
    %c0_i32_1 = arith.constant 0 : i32
    return %c0_i32, %c0_i32_0 : i32, i32
  }
  func.func @transform_2(%arg0: i32) -> (i32, i32) {
    %c0_i32 = arith.constant 0 : i32
    %c0_i32_0 = arith.constant 0 : i32
    %c0_i32_1 = arith.constant 0 : i32
    return %c0_i32, %c0_i32_0 : i32, i32
  }
  func.func @transform_3(%arg0: i32) -> (i32, i32) {
    %c0_i32 = arith.constant 0 : i32
    %c0_i32_0 = arith.constant 0 : i32
    %c0_i32_1 = arith.constant 0 : i32
    return %c0_i32, %c0_i32_0 : i32, i32
  }
  func.func @transform_4(%arg0: i32) -> (i32, i32) {
    %c0_i32 = arith.constant 0 : i32
    %c0_i32_0 = arith.constant 0 : i32
    %c0_i32_1 = arith.constant 0 : i32
    return %c0_i32, %c0_i32_0 : i32, i32
  }
  func.func @transform_5(%arg0: i32) -> (i32, i32) {
    %c0_i32 = arith.constant 0 : i32
    %c0_i32_0 = arith.constant 0 : i32
    return %arg0, %c0_i32 : i32, i32
  }
  func.func @transform_6(%arg0: i32) -> (i32, i32) {
    %c0_i32 = arith.constant 0 : i32
    %c0_i32_0 = arith.constant 0 : i32
    return %arg0, %c0_i32 : i32, i32
  }
}

</mosaic_0001>

<llo_original>
// kernel: tpu_custom_call.1
$region0: #{tpu_custom_call.1}
  #allocation0 [shape = 'u32[]', space=smem, size = 0x4, offset = 0x4, fixed_abs, tag = 'smem constant byte address 0x4 - core index']
  #allocation1 [shape = 'u32[144,128]{1,0:T(1,128)}', space=vmem, size = 0x12000, scoped, tag = 'internal scratch']
  %s0 = inlined_call_operand.hbm [shape: bf16[16,32], index: 0, kind: input, shape index: {}]
  %s1 = inlined_call_operand.hbm [shape: bf16[32,128], index: 1, kind: input, shape index: {}]
  %s2 = inlined_call_operand.hbm [shape: bf16[32,128], index: 2, kind: input, shape index: {}]
  %s3 = inlined_call_operand.vmem [shape: f32[1,128], index: 3, kind: input, shape index: {}]
  %s4 = inlined_call_operand.vmem [shape: f32[1,128], index: 4, kind: input, shape index: {}]
  %s5 = inlined_call_operand.hbm [shape: f32[16,128], index: 5, kind: output, shape index: {0}]
  %s6 = inlined_call_operand.hbm [shape: f32[16,128], index: 6, kind: output, shape index: {1}]
  %7 = xla_tuple %s5, %s6
  %s8 = sld [smem:[#allocation0]]
  $region50: #{tpu_custom_call.1} parent=0
    _
  %s10 = ssub.s32 1, %s8
  %s11 = scalar_select 0, %s10, %s8
  $region1: #{tpu_custom_call.1} parent=0
    #allocation2 [shape = 'u8[4096]{0}', space=vmem, size = 0x1000, scoped, tag = 'input window, operand 0, single buffered']
    #allocation3 [shape = 's32[1]{0}', space=sflag, size = 0x4, scoped, tag = 'scoped memory for tpu_custom_call.1']
    #allocation4 [shape = 's32[1]{0}', space=sflag, size = 0x4, scoped, tag = 'scoped memory for tpu_custom_call.1']
    #allocation5 [shape = 'u8[8192]{0}', space=vmem, size = 0x2000, scoped, tag = 'input window, operand 1, single buffered']
    #allocation6 [shape = 's32[1]{0}', space=sflag, size = 0x4, scoped, tag = 'scoped memory for tpu_custom_call.1']
    #allocation7 [shape = 'u8[8192]{0}', space=vmem, size = 0x2000, scoped, tag = 'input window, operand 2, single buffered']
    #allocation8 [shape = 'u8[8192]{0}', space=vmem, size = 0x2000, scoped, tag = 'output window, operand 0, single buffered']
    #allocation9 [shape = 'u8[8192]{0}', space=vmem, size = 0x2000, scoped, tag = 'output window, operand 1, single buffered']
    #allocation10 [shape = 's32[1]{0}', space=sflag, size = 0x4, scoped, tag = 'scoped memory for tpu_custom_call.1']
    %12 = vsyncpa [#allocation3], 0
    %13 = vsyncpa [#allocation6], 0
    %14 = vsyncpa [#allocation4], 0
    %15 = vsyncpa [#allocation10], 0
    // Predicated region
    $region2: #{tpu_custom_call.1} parent=1 // pred_check
      _
    $region3: #{tpu_custom_call.1} parent=1 // pred_check_branch
      %17 = sbr.rel (0) target = $region5
    $region4: #{tpu_custom_call.1} parent=1 // pred_region
      %s19 = ssub.s32 128, 128
      %20 = vsyncadd [#allocation3], %s19
      %s21 = sshll.u32 [#allocation2], 4
      %s22 = int_to_ptr.vmem [resolvable:$true] %s21
      %27 = dma.hbm_to_vmem [thread:$0]  %s0, 128, %s22, [#allocation3], 64, 64, 4
    $region5: #{tpu_custom_call.1} parent=1 // pred_fallthru
      _
    // Predicated region
    $region6: #{tpu_custom_call.1} parent=1 // pred_check
      _
    $region7: #{tpu_custom_call.1} parent=1 // pred_check_branch
      %29 = sbr.rel (0) target = $region9
    $region8: #{tpu_custom_call.1} parent=1 // pred_region
      %s31 = ssub.s32 256, 256
      %32 = vsyncadd [#allocation6], %s31
      %s33 = sshll.u32 [#allocation5], 4
      %s34 = int_to_ptr.vmem [resolvable:$true] %s33
      %39 = dma.hbm_to_vmem [thread:$0]  %s1, 256, %s34, [#allocation6], 64, 64, 4
    $region9: #{tpu_custom_call.1} parent=1 // pred_fallthru
      _
    // Predicated region
    $region10: #{tpu_custom_call.1} parent=1 // pred_check
      _
    $region11: #{tpu_custom_call.1} parent=1 // pred_check_branch
      %41 = sbr.rel (0) target = $region13
    $region12: #{tpu_custom_call.1} parent=1 // pred_region
      %s43 = ssub.s32 256, 256
      %44 = vsyncadd [#allocation6], %s43
      %s45 = sshll.u32 [#allocation7], 4
      %s46 = int_to_ptr.vmem [resolvable:$true] %s45
      %51 = dma.hbm_to_vmem [thread:$0]  %s2, 256, %s46, [#allocation6], 64, 64, 4
    $region13: #{tpu_custom_call.1} parent=1 // pred_fallthru
      _
    // Predicated region
    $region14: #{tpu_custom_call.1} parent=1 // pred_check
      _
    $region15: #{tpu_custom_call.1} parent=1 // pred_check_branch
      %53 = sbr.rel (0) target = $region17
    $region16: #{tpu_custom_call.1} parent=1 // pred_region
      _
    $region17: #{tpu_custom_call.1} parent=1 // pred_fallthru
      _
    // Predicated region
    $region18: #{tpu_custom_call.1} parent=1 // pred_check
      _
    $region19: #{tpu_custom_call.1} parent=1 // pred_check_branch
      %55 = sbr.rel (0) target = $region21
    $region20: #{tpu_custom_call.1} parent=1 // pred_region
      _
    $region21: #{tpu_custom_call.1} parent=1 // pred_fallthru
      _
    // Predicated region
    $region22: #{tpu_custom_call.1} parent=1 // pred_check
      _
    $region23: #{tpu_custom_call.1} parent=1 // pred_check_branch
      %57 = sbr.rel (0) target = $region25
    $region24: #{tpu_custom_call.1} parent=1 // pred_region
      %58 = dma.done [#allocation3], 128
    $region25: #{tpu_custom_call.1} parent=1 // pred_fallthru
      _
    // Predicated region
    $region26: #{tpu_custom_call.1} parent=1 // pred_check
      _
    $region27: #{tpu_custom_call.1} parent=1 // pred_check_branch
      %60 = sbr.rel (0) target = $region29
    $region28: #{tpu_custom_call.1} parent=1 // pred_region
      %61 = dma.done [#allocation6], 256
    $region29: #{tpu_custom_call.1} parent=1 // pred_fallthru
      _
    // Predicated region
    $region30: #{tpu_custom_call.1} parent=1 // pred_check
      _
    $region31: #{tpu_custom_call.1} parent=1 // pred_check_branch
      %63 = sbr.rel (0) target = $region33
    $region32: #{tpu_custom_call.1} parent=1 // pred_region
      %64 = dma.done [#allocation6], 256
    $region33: #{tpu_custom_call.1} parent=1 // pred_fallthru
      _
    %v66 = vld [vmem:[#allocation2] sm:$0xf]
    %v67 = vld [vmem:[#allocation2 + $0x4] sm:$0xf]
    %v68 = vld [vmem:[#allocation5] sm:$0xf]
    %v69 = vld [vmem:[#allocation5 + $0x4] sm:$0xf]
    %v70 = vld [vmem:[#allocation5 + $0x8] sm:$0xf]
    %v71 = vld [vmem:[#allocation5 + $0xc] sm:$0xf]
    %v72 = vld [vmem:[%s3] sm:$0x1]
    %v74 = vlaneseq
    %v75 = vshrl.u32 %v74, 7
    %v76 = vsub.s32 0, %v75
    %v77 = vrot.slane %v72, %v76
    %v81 = vunpack.c.l.b16 %v66
    %v82 = vunpack.c.l.b16 %v67
    %v83 = vpack.c.b16 %v82, %v81
    %v88 = vunpack.c.l.b16 %v68
    %v89 = vunpack.c.l.b16 %v69
    %v90 = vunpack.c.l.b16 %v70
    %v91 = vunpack.c.l.b16 %v71
    %v92 = vpack.c.b16 %v89, %v88
    %v93 = vpack.c.b16 %v91, %v90
    %vm96 = vcmask 261120
    %v98 = vsel %vm96, %v83, 0
    %100 = vmatprep.subr.bf16.mxu0 0
    %101 = vmatpush1.bf16.msra.mxu0 0
    %102 = vmatprep.subr.bf16.mxu0 0
    %103 = vmatpush1.bf16.msra.mxu0 0
    %104 = vmatprep.subr.bf16.mxu0 0
    %105 = vmatpush1.bf16.msra.mxu0 0
    %106 = vmatprep.subr.bf16.mxu0 0
    %107 = vmatpush1.bf16.msra.mxu0 0
    %108 = vmatprep.subr.bf16.mxu0 0
    %109 = vmatpush1.bf16.msra.mxu0 0
    %110 = vmatprep.subr.bf16.mxu0 0
    %111 = vmatpush1.bf16.msra.mxu0 0
    %112 = vmatprep.subr.bf16.mxu0 0
    %113 = vmatpush1.bf16.msra.mxu0 %v93
    %114 = vmatprep.subr.bf16.mxu0 0
    %115 = vmatpush1.bf16.msra.mxu0 %v92
    %116 = vmatprep.subr.bf16.mxu0 0
    %117 = vmatpush2.bf16.msra.mxu0 0
    %118 = vmatprep.subr.bf16.mxu0 0
    %119 = vmatpush2.bf16.msra.mxu0 0
    %120 = vmatprep.subr.bf16.mxu0 0
    %121 = vmatpush2.bf16.msra.mxu0 0
    %122 = vmatprep.subr.bf16.mxu0 0
    %123 = vmatpush2.bf16.msra.mxu0 0
    %124 = vmatprep.subr.bf16.mxu0 0
    %125 = vmatpush2.bf16.msra.mxu0 0
    %126 = vmatprep.subr.bf16.mxu0 0
    %127 = vmatpush2.bf16.msra.mxu0 0
    %128 = vmatprep.subr.bf16.mxu0 0
    %129 = vmatpush2.bf16.msra.mxu0 0
    %130 = vmatprep.subr.bf16.mxu0 0
    %131 = vmatpush2.bf16.msra.mxu0 0
    %132 = vmatprep.mubr.bf16.mxu0 0
    %133 = vmatmul.mubr.bf16.gmra.mxu0 %v98
    %v134 = vpop.f32.mrf.mxu0
    %v135 = vadd.f32 %v77, %v134
    %v136 = vpop.f32.mrf.mxu0
    %v137 = vpop.f32.mrf.mxu0
    %v138 = vadd.f32 %v77, %v137
    %v139 = vpop.f32.mrf.mxu0
    %140 = vdwg.mxu0
    %141 = vst [vmem:[#allocation8] sm:$0xff] %v135
    %142 = vst [vmem:[#allocation8 + $0x8] sm:$0xff] %v138
    %v143 = vld [vmem:[#allocation7] sm:$0xf]
    %v144 = vld [vmem:[#allocation7 + $0x4] sm:$0xf]
    %v145 = vld [vmem:[#allocation7 + $0x8] sm:$0xf]
    %v146 = vld [vmem:[#allocation7 + $0xc] sm:$0xf]
    %v147 = vld [vmem:[%s4] sm:$0x1]
    %v149 = vlaneseq
    %v150 = vshrl.u32 %v149, 7
    %v151 = vsub.s32 0, %v150
    %v152 = vrot.slane %v147, %v151
    %v158 = vunpack.c.l.b16 %v143
    %v159 = vunpack.c.l.b16 %v144
    %v160 = vunpack.c.l.b16 %v145
    %v161 = vunpack.c.l.b16 %v146
    %v162 = vpack.c.b16 %v159, %v158
    %v163 = vpack.c.b16 %v161, %v160
    %166 = vmatprep.subr.bf16.mxu0 0
    %167 = vmatpush1.bf16.msra.mxu0 0
    %168 = vmatprep.subr.bf16.mxu0 0
    %169 = vmatpush1.bf16.msra.mxu0 0
    %170 = vmatprep.subr.bf16.mxu0 0
    %171 = vmatpush1.bf16.msra.mxu0 0
    %172 = vmatprep.subr.bf16.mxu0 0
    %173 = vmatpush1.bf16.msra.mxu0 0
    %174 = vmatprep.subr.bf16.mxu0 0
    %175 = vmatpush1.bf16.msra.mxu0 0
    %176 = vmatprep.subr.bf16.mxu0 0
    %177 = vmatpush1.bf16.msra.mxu0 0
    %178 = vmatprep.subr.bf16.mxu0 0
    %179 = vmatpush1.bf16.msra.mxu0 %v163
    %180 = vmatprep.subr.bf16.mxu0 0
    %181 = vmatpush1.bf16.msra.mxu0 %v162
    %182 = vmatprep.subr.bf16.mxu0 0
    %183 = vmatpush2.bf16.msra.mxu0 0
    %184 = vmatprep.subr.bf16.mxu0 0
    %185 = vmatpush2.bf16.msra.mxu0 0
    %186 = vmatprep.subr.bf16.mxu0 0
    %187 = vmatpush2.bf16.msra.mxu0 0
    %188 = vmatprep.subr.bf16.mxu0 0
    %189 = vmatpush2.bf16.msra.mxu0 0
    %190 = vmatprep.subr.bf16.mxu0 0
    %191 = vmatpush2.bf16.msra.mxu0 0
    %192 = vmatprep.subr.bf16.mxu0 0
    %193 = vmatpush2.bf16.msra.mxu0 0
    %194 = vmatprep.subr.bf16.mxu0 0
    %195 = vmatpush2.bf16.msra.mxu0 0
    %196 = vmatprep.subr.bf16.mxu0 0
    %197 = vmatpush2.bf16.msra.mxu0 0
    %198 = vmatprep.mubr.bf16.mxu0 0
    %199 = vmatmul.mubr.bf16.gmra.mxu0 %v98
    %v200 = vpop.f32.mrf.mxu0
    %v201 = vadd.f32 %v152, %v200
    %v202 = vpop.f32.mrf.mxu0
    %v203 = vpop.f32.mrf.mxu0
    %v204 = vadd.f32 %v152, %v203
    %v205 = vpop.f32.mrf.mxu0
    %206 = vdwg.mxu0
    %207 = vst [vmem:[#allocation9] sm:$0xff] %v201
    %208 = vst [vmem:[#allocation9 + $0x8] sm:$0xff] %v204
    // Predicated region
    $region34: #{tpu_custom_call.1} parent=1 // pred_check
      _
    $region35: #{tpu_custom_call.1} parent=1 // pred_check_branch
      %210 = sbr.rel (0) target = $region37
    $region36: #{tpu_custom_call.1} parent=1 // pred_region
      %s212 = ssub.s32 256, 256
      %213 = vsyncadd [#allocation4], %s212
      %s214 = sshll.u32 [#allocation8], 4
      %s215 = int_to_ptr.vmem [resolvable:$true] %s214
      %220 = dma.vmem_to_hbm [thread:$0]  %s215, 256, %s5, [#allocation4], 128, 128, 8
    $region37: #{tpu_custom_call.1} parent=1 // pred_fallthru
      _
    // Predicated region
    $region38: #{tpu_custom_call.1} parent=1 // pred_check
      _
    $region39: #{tpu_custom_call.1} parent=1 // pred_check_branch
      %222 = sbr.rel (0) target = $region41
    $region40: #{tpu_custom_call.1} parent=1 // pred_region
      %s224 = ssub.s32 256, 256
      %225 = vsyncadd [#allocation10], %s224
      %s226 = sshll.u32 [#allocation9], 4
      %s227 = int_to_ptr.vmem [resolvable:$true] %s226
      %232 = dma.vmem_to_hbm [thread:$0]  %s227, 256, %s6, [#allocation10], 128, 128, 8
    $region41: #{tpu_custom_call.1} parent=1 // pred_fallthru
      _
    // Predicated region
    $region42: #{tpu_custom_call.1} parent=1 // pred_check
      _
    $region43: #{tpu_custom_call.1} parent=1 // pred_check_branch
      %234 = sbr.rel (0) target = $region45
    $region44: #{tpu_custom_call.1} parent=1 // pred_region
      %235 = dma.done [#allocation4], 256
    $region45: #{tpu_custom_call.1} parent=1 // pred_fallthru
      _
    // Predicated region
    $region46: #{tpu_custom_call.1} parent=1 // pred_check
      _
    $region47: #{tpu_custom_call.1} parent=1 // pred_check_branch
      %237 = sbr.rel (0) target = $region49
    $region48: #{tpu_custom_call.1} parent=1 // pred_region
      %238 = dma.done [#allocation10], 256
    $region49: #{tpu_custom_call.1} parent=1 // pred_fallthru
      _
    %239 = vsyncpa [#allocation3], 1
    %240 = vsyncpa [#allocation6], 1
    %241 = vsyncpa [#allocation4], 1
    %242 = vsyncpa [#allocation10], 1

</llo_original>
